<compile_context>
chip_gen: v5e
topology: v5e:2x2
jax: 0.10.0
libtpu: 0.0.40
codegen_flags: <defaults>
</compile_context>

<pallas_src>
import numpy as np
import jax
import jax.numpy as jnp
from jax.experimental import pallas as pl
from jax.experimental.pallas import tpu as pltpu


def make_index(channels: int, direction: int, groups: int) -> np.ndarray:
    """Reproduces _IndexSelect.__init__ permutation construction."""
    if channels % groups != 0:
        raise ValueError("Channels should be a multiple of the groups")
    idx = np.zeros(channels, dtype=np.int32)
    count = 0
    if direction > 0:
        for gidx in range(groups):
            for nidx in range(gidx, channels, groups):
                idx[count] = nidx
                count += 1
    else:
        for gidx in range(groups):
            for nidx in range(gidx, channels, groups):
                idx[nidx] = count
                count += 1
    return idx


def _pick_batch_tile(batch: int, bytes_per_batch_row: int,
                     cap_bytes: int = 4 << 20) -> int:
    """Largest divisor of `batch` whose block stays under the VMEM cap."""
    for bt in range(batch, 0, -1):
        if batch % bt == 0 and bt * bytes_per_batch_row <= cap_bytes:
            return bt
    return 1


def _copy_reshape_kernel(x_ref, o_ref):
    # Pure data movement; the reshape only inserts/removes a unit dim in a
    # leading position (last two dims unchanged -> no lane/sublane shuffle).
    o_ref[...] = x_ref[...].reshape(o_ref.shape)


def _channel_shuffle_structured(x: jax.Array, groups: int,
                                direction: int) -> jax.Array:
    """Fast path: the permutation is a (groups, C/groups) transpose."""
    B, C, H, W = x.shape
    Cg = C // groups
    HW = H * W
    itemsize = x.dtype.itemsize
    bt = _pick_batch_tile(B, Cg * HW * itemsize)

    cost = pl.CostEstimate(flops=0, transcendentals=0,
                           bytes_accessed=2 * x.size * itemsize)
    cparams = pltpu.CompilerParams(
        dimension_semantics=("parallel", "parallel"))

    if direction > 0:
        # out[b, g*Cg + j] = x[b, j*groups + g]
        # input viewed as (B, Cg, groups*HW): group g lives in lane block g.
        x_r = x.reshape(B, Cg, groups * HW)
        in_spec = pl.BlockSpec((bt, Cg, HW), lambda b, g: (b, 0, g))
        out_shape = jax.ShapeDtypeStruct((B, groups, Cg, HW), x.dtype)
        out_spec = pl.BlockSpec((bt, 1, Cg, HW), lambda b, g: (b, g, 0, 0))
    else:
        # out[b, j*groups + g] = x[b, g*Cg + j]
        x_r = x.reshape(B, groups, Cg, HW)
        in_spec = pl.BlockSpec((bt, 1, Cg, HW), lambda b, g: (b, g, 0, 0))
        out_shape = jax.ShapeDtypeStruct((B, Cg, groups * HW), x.dtype)
        out_spec = pl.BlockSpec((bt, Cg, HW), lambda b, g: (b, 0, g))

    out = pl.pallas_call(
        _copy_reshape_kernel,
        out_shape=out_shape,
        grid=(B // bt, groups),
        in_specs=[in_spec],
        out_specs=out_spec,
        compiler_params=cparams,
        cost_estimate=cost,
    )(x_r)
    return out.reshape(B, C, H, W)


def _index_select_gather(x: jax.Array, index) -> jax.Array:
    """General fallback: per-output-channel gather via scalar prefetch."""
    B, C, H, W = x.shape
    itemsize = x.dtype.itemsize
    bt = _pick_batch_tile(B, H * W * itemsize)
    index = jnp.asarray(index, dtype=jnp.int32)

    def kernel(idx_ref, x_ref, o_ref):
        del idx_ref  # gather realized by the data-dependent input BlockSpec
        o_ref[...] = x_ref[...]

    grid_spec = pltpu.PrefetchScalarGridSpec(
        num_scalar_prefetch=1,
        grid=(B // bt, C),
        in_specs=[pl.BlockSpec((bt, 1, H, W),
                               lambda b, c, idx: (b, idx[c], 0, 0))],
        out_specs=pl.BlockSpec((bt, 1, H, W),
                               lambda b, c, idx: (b, c, 0, 0)),
    )
    return pl.pallas_call(
        kernel,
        out_shape=jax.ShapeDtypeStruct(x.shape, x.dtype),
        grid_spec=grid_spec,
        compiler_params=pltpu.CompilerParams(
            dimension_semantics=("parallel", "parallel")),
        cost_estimate=pl.CostEstimate(flops=0, transcendentals=0,
                                      bytes_accessed=2 * x.size * itemsize),
    )(index, x)


class IndexSelect:
    """Pallas equivalent of _IndexSelect.forward (torch.index_select on dim 1)."""

    def __init__(self, channels: int, direction: int, groups: int):
        if channels % groups != 0:
            raise ValueError("Channels should be a multiple of the groups")
        self.channels = channels
        self.direction = direction
        self.groups = groups
        self.index = make_index(channels, direction, groups)

    def __call__(self, x: jax.Array, force_general: bool = False) -> jax.Array:
        B, C, H, W = x.shape
        assert C == self.channels
        # Fast structured path needs a lane-dense (multiple-of-128) H*W slab.
        if not force_general and (H * W) % 128 == 0:
            return _channel_shuffle_structured(x, self.groups, self.direction)
        return _index_select_gather(x, self.index)


if __name__ == "__main__":
    # Module config: channels=4, groups=2; forward (+1) and reverse (-1).
    channels, groups = 4, 2
    B, H, W = 2, 16, 16

    key = jax.random.PRNGKey(0)
    x = jax.random.normal(key, (B, channels, H, W), dtype=jnp.float32)

    fwd = IndexSelect(channels, +1, groups)
    rev = IndexSelect(channels, -1, groups)

    # Structured fast path (lane-dense, grouped DMAs).
    out_fwd = jax.block_until_ready(fwd(x))
    ref_fwd = jnp.take(x, jnp.asarray(fwd.index), axis=1)
    np.testing.assert_array_equal(np.asarray(out_fwd), np.asarray(ref_fwd))

    # Reverse permutation inverts the forward one.
    out_rev = jax.block_until_ready(rev(out_fwd))
    np.testing.assert_array_equal(np.asarray(out_rev), np.asarray(x))

    # Also exercise the general scalar-prefetch gather fallback.
    out_gen = jax.block_until_ready(fwd(x, force_general=True))
    np.testing.assert_array_equal(np.asarray(out_gen), np.asarray(ref_fwd))

    print("KERNEL_OK")
</pallas_src>

<mosaic_0001>
module attributes {stable_mosaic.version = 11 : i64} {
  func.func @_copy_reshape_kernel(%arg0: i32, %arg1: i32, %arg2: memref<2x2x256xf32, #tpu.memory_space<vmem>>, %arg3: memref<2x1x2x256xf32, #tpu.memory_space<vmem>>) attributes {dimension_semantics = [#tpu.dimension_semantics<parallel>, #tpu.dimension_semantics<parallel>], iteration_bounds = array<i64: 1, 2>, scalar_prefetch = 0 : i64, scratch_operands = 0 : i64, tpu.core_type = #tpu.core_type<tc>, window_params = [{transform_indices = @transform_0, window_bounds = array<i64: 2, 2, 256>}, {transform_indices = @transform_1, window_bounds = array<i64: 2, 1, 2, 256>}]} {
    %c0 = arith.constant 0 : index
    %c0_0 = arith.constant 0 : index
    %c0_1 = arith.constant 0 : index
    %0 = vector.load %arg2[%c0, %c0_0, %c0_1] : memref<2x2x256xf32, #tpu.memory_space<vmem>>, vector<2x2x256xf32>
    %1 = vector.shape_cast %0 : vector<2x2x256xf32> to vector<2x1x2x256xf32>
    %c0_2 = arith.constant 0 : index
    %c0_3 = arith.constant 0 : index
    %c0_4 = arith.constant 0 : index
    %c0_5 = arith.constant 0 : index
    %2 = vector.load %arg3[%c0_2, %c0_3, %c0_4, %c0_5] : memref<2x1x2x256xf32, #tpu.memory_space<vmem>>, vector<2x1x2x256xf32>
    tpu.vector_store %arg3[%c0_2, %c0_3, %c0_4, %c0_5], %1 {strides = array<i32>} : memref<2x1x2x256xf32, #tpu.memory_space<vmem>>, vector<2x1x2x256xf32>,
    return
  }
  func.func @transform_0(%arg0: i32, %arg1: i32) -> (i32, i32, i32) {
    %c0_i32 = arith.constant 0 : i32
    %c0_i32_0 = arith.constant 0 : i32
    return %arg0, %c0_i32, %arg1 : i32, i32, i32
  }
  func.func @transform_1(%arg0: i32, %arg1: i32) -> (i32, i32, i32, i32) {
    %c0_i32 = arith.constant 0 : i32
    %c0_i32_0 = arith.constant 0 : i32
    %c0_i32_1 = arith.constant 0 : i32
    return %arg0, %arg1, %c0_i32, %c0_i32_0 : i32, i32, i32, i32
  }
}

</mosaic_0001>

<llo_original>
// kernel: tpu_custom_call.1
$region0: #{tpu_custom_call.1}
  #allocation0 [shape = 'u32[]', space=smem, size = 0x4, offset = 0x4, fixed_abs, tag = 'smem constant byte address 0x4 - core index']
  #allocation1 [shape = 'u32[72,128]{1,0:T(1,128)}', space=vmem, size = 0x9000, scoped, tag = 'internal scratch']
  %s0 = inlined_call_operand.hbm [shape: f32[2,2,512], index: 0, kind: input, shape index: {}]
  %s1 = inlined_call_operand.hbm [shape: f32[2,2,2,256], index: 1, kind: output, shape index: {}]
  %s2 = sld [smem:[#allocation0]]
  $region41: #{tpu_custom_call.1} parent=0
    _
  %s4 = ssub.s32 1, %s2
  %s5 = scalar_select 0, %s4, %s2
  $region1: #{tpu_custom_call.1} parent=0
    #allocation2 [shape = 'u8[8192]{0}', space=vmem, size = 0x2000, scoped, tag = 'input window, operand 0']
    #allocation3 [shape = 's32[2]{0}', space=sflag, size = 0x8, scoped, tag = 'scoped memory for tpu_custom_call.1']
    #allocation4 [shape = 's32[2]{0}', space=sflag, size = 0x8, scoped, tag = 'scoped memory for tpu_custom_call.1']
    #allocation5 [shape = 'u8[8192]{0}', space=vmem, size = 0x2000, scoped, tag = 'output window, operand 0']
    %6 = vsyncpa [#allocation3], 0
    %s7 = scalar_lea.sflag [#allocation3], 1
    %8 = vsyncpa %s7, 0
    %9 = vsyncpa [#allocation4], 0
    %s10 = scalar_lea.sflag [#allocation4], 1
    %11 = vsyncpa %s10, 0
    loop: start=0, step=1, limit=4
    $region2: #{tpu_custom_call.1} parent=1 // loop_pre_header
      _
    $region3: #{tpu_custom_call.1} parent=1 // loop_header
      %s13 = sphi 0, %s17
      %p14 = scmp.ge.s32.totalorder %s13, 4
      %s20 = sphi 0, %s32
      %s21 = sphi 0, %s28
      %s22 = sphi 0, %s20
      %s23 = sphi 0, %s21
      %s24 = sphi 0, %s22
      %s25 = sphi 0, %s23
      %s37 = sphi 0, %s39
      %s40 = sphi 0, %s37
      %s41 = sphi 0, %s40
      %s57 = sphi 0, %s41
      %s65 = sphi 0, %s67
      %s68 = sphi 0, %s65
      %s69 = sphi 0, %s68
      %s85 = sphi 0, %s69
    $region4: #{tpu_custom_call.1} parent=1 // loop_header_branch
      %16 = sbr.rel (%p14) target = $region8
    $region5: #{tpu_custom_call.1} parent=1 // loop_body
      %s18 = ssub.s32 %s13, 1
      %s19 = ssub.s32 %s13, 2
      %s26 = sadd.s32 1, %s21
      %p27 = scmp.ge.s32.totalorder %s26, 2
      %s28 = scalar_select %p27, 0, %s26
      %s29 = sadd.s32 1, %s20
      %s30 = scalar_select %p27, %s29, %s20
      %p31 = scmp.ge.s32.totalorder %s30, 1
      %s32 = scalar_select %p31, 0, %s30
      %s33 = ssub.s32 %s20, %s32
      %s34 = ssub.s32 %s21, %s28
      %s35 = sor.u32 %s33, %s34
      %p36 = scmp.eq.s32.totalorder %s35, 0
      %s38 = sadd.s32 %s37, 1
      %s39 = scalar_select %p36, %s37, %s38
      %p42 = pneg %p36
      %p43 = scmp.eq.s32.totalorder %s13, 1
      %p44 = por %p42, %p43
      %p45 = scmp.ne.s32.totalorder %s37, %s40
      %p46 = scmp.eq.s32.totalorder %s13, 0
      %p47 = por %p45, %p46
      %p48 = scmp.ne.s32.totalorder %s37, %s40
      %p49 = scmp.eq.s32.totalorder %s18, 1
      %p50 = por %p48, %p49
      %p51 = scmp.ne.s32.totalorder %s40, %s41
      %p52 = scmp.eq.s32.totalorder %s18, 0
      %p53 = por %p51, %p52
      %p54 = scmp.ne.s32.totalorder %s40, %s41
      %p55 = scmp.eq.s32.totalorder %s19, 1
      %p56 = por %p54, %p55
      %p58 = scmp.ne.s32.totalorder %s41, %s57
      %p59 = scmp.eq.s32.totalorder %s19, 0
      %p60 = por %p58, %p59
      %s61 = ssub.s32 %s20, %s32
      %s62 = ssub.s32 %s21, %s28
      %s63 = sor.u32 %s61, %s62
      %p64 = scmp.eq.s32.totalorder %s63, 0
      %s66 = sadd.s32 %s65, 1
      %s67 = scalar_select %p64, %s65, %s66
      %p70 = pneg %p64
      %p71 = scmp.eq.s32.totalorder %s13, 1
      %p72 = por %p70, %p71
      %p73 = scmp.ne.s32.totalorder %s65, %s68
      %p74 = scmp.eq.s32.totalorder %s13, 0
      %p75 = por %p73, %p74
      %p76 = scmp.ne.s32.totalorder %s65, %s68
      %p77 = scmp.eq.s32.totalorder %s18, 1
      %p78 = por %p76, %p77
      %p79 = scmp.ne.s32.totalorder %s68, %s69
      %p80 = scmp.eq.s32.totalorder %s18, 0
      %p81 = por %p79, %p80
      %p82 = scmp.ne.s32.totalorder %s68, %s69
      %p83 = scmp.eq.s32.totalorder %s19, 1
      %p84 = por %p82, %p83
      %p86 = scmp.ne.s32.totalorder %s69, %s85
      %p87 = scmp.eq.s32.totalorder %s19, 0
      %p88 = por %p86, %p87
      %p89 = scmp.le.s32.totalorder 1, %s13
      %p90 = scmp.lt.s32.totalorder %s13, 3
      %p91 = pnand %p89, %p90
      %p92 = pneg %p91
      // Predicated region
      $region9: #{tpu_custom_call.1} parent=5 // pred_check
        _
      $region10: #{tpu_custom_call.1} parent=5 // pred_check_branch
        %94 = sbr.rel (%p91) target = $region12
      $region11: #{tpu_custom_call.1} parent=5 // pred_region
        %s95 = ssub.s32 %s13, 1
      $region12: #{tpu_custom_call.1} parent=5 // pred_fallthru
        _
      %p96 = scmp.lt.s32.totalorder %s13, 2
      // Predicated region
      $region13: #{tpu_custom_call.1} parent=5 // pred_check
        %p97 = pneg %p96
      $region14: #{tpu_custom_call.1} parent=5 // pred_check_branch
        %99 = sbr.rel (%p97) target = $region16
      $region15: #{tpu_custom_call.1} parent=5 // pred_region
        // Predicated region
        $region17: #{tpu_custom_call.1} parent=15 // pred_check
          %p100 = pneg %p47
        $region18: #{tpu_custom_call.1} parent=15 // pred_check_branch
          %102 = sbr.rel (%p100) target = $region20
        $region19: #{tpu_custom_call.1} parent=15 // pred_region
          %s103 = sand.u32 %s37, 1
          %s104 = scalar_lea.sflag [#allocation3], %s103
          %s105 = sand.u32 %s37, 1
          %s106 = smul.addr %s105, 8
          %s107 = scalar_lea.vmem [#allocation2], %s106
          %s108 = smul.u32 2, %s20
          %s109 = smul.u32 2, %s21
          %111 = vsyncadd %s104, 0
          %s112 = smul.addr %s108, 4
          %s113 = sadd.s32 %s109, %s112
          %s114 = smul.addr %s113, 2
          %s115 = scalar_lea.hbm %s0, %s114
          %s116 = sshll.u32 %s115, 4
          %s117 = int_to_ptr.hbm [resolvable:$true] %s116
          %s118 = sshll.u32 %s107, 4
          %s119 = int_to_ptr.vmem [resolvable:$true] %s118
          %124 = dma.hbm_to_vmem [thread:$0]  %s117, 128, %s119, %s104, 128, 64, 4
        $region20: #{tpu_custom_call.1} parent=15 // pred_fallthru
          _
      $region16: #{tpu_custom_call.1} parent=5 // pred_fallthru
        _
      %p125 = scmp.le.s32.totalorder 1, %s13
      %p126 = scmp.lt.s32.totalorder %s13, 3
      %p127 = pnand %p125, %p126
      %p128 = pneg %p127
      // Predicated region
      $region21: #{tpu_custom_call.1} parent=5 // pred_check
        _
      $region22: #{tpu_custom_call.1} parent=5 // pred_check_branch
        %130 = sbr.rel (%p127) target = $region24
      $region23: #{tpu_custom_call.1} parent=5 // pred_region
        %s131 = ssub.s32 %s13, 1
        %s132 = sand.u32 %s40, 1
        %s133 = scalar_lea.sflag [#allocation3], %s132
        %s134 = sand.u32 %s40, 1
        %s135 = smul.addr %s134, 8
        %s136 = scalar_lea.vmem [#allocation2], %s135
        // Predicated region
        $region25: #{tpu_custom_call.1} parent=23 // pred_check
          %p137 = pneg %p53
        $region26: #{tpu_custom_call.1} parent=23 // pred_check_branch
          %139 = sbr.rel (%p137) target = $region28
        $region27: #{tpu_custom_call.1} parent=23 // pred_region
          %141 = dma.done %s133, 128
        $region28: #{tpu_custom_call.1} parent=23 // pred_fallthru
          _
        %s142 = sand.u32 %s40, 1
        %s143 = scalar_lea.sflag [#allocation3], %s142
        %s144 = sand.u32 %s40, 1
        %s145 = smul.addr %s144, 8
        %s146 = scalar_lea.vmem [#allocation2], %s145
        %p147 = pneg %p53
        %p148 = pneg %p50
        %p149 = pneg %p81
        %p150 = pneg %p78
        %s151 = sand.u32 %s68, 1
        %s152 = scalar_lea.sflag [#allocation4], %s151
        %s153 = sand.u32 %s68, 1
        %s154 = smul.addr %s153, 8
        %s155 = scalar_lea.vmem [#allocation5], %s154
        %s156 = smul.u32 2, %s22
        %s157 = smul.u32 2, %s23
        %s158 = smul.u32 2, %s22
        %v159 = vld [vmem:[%s136] sm:$0xf]
        %v160 = vld [vmem:[%s136 + $0x4] sm:$0xf]
        %161 = vst [vmem:[%s155] sm:$0xf] %v159
        %162 = vst [vmem:[%s155 + $0x4] sm:$0xf] %v160
        %s163 = sand.u32 %s68, 1
        %s164 = scalar_lea.sflag [#allocation4], %s163
        %s165 = sand.u32 %s68, 1
        %s166 = smul.addr %s165, 8
        %s167 = scalar_lea.vmem [#allocation5], %s166
        // Predicated region
        $region29: #{tpu_custom_call.1} parent=23 // pred_check
          %p168 = pneg %p78
        $region30: #{tpu_custom_call.1} parent=23 // pred_check_branch
          %170 = sbr.rel (%p168) target = $region32
        $region31: #{tpu_custom_call.1} parent=23 // pred_region
          %s171 = smul.u32 2, %s22
          %173 = vsyncadd %s164, 0
          %s174 = smul.addr %s23, 2
          %s175 = smul.addr %s171, 4
          %s176 = sadd.s32 %s174, %s175
          %s177 = smul.addr %s176, 2
          %s178 = scalar_lea.hbm %s1, %s177
          %s179 = sshll.u32 %s167, 4
          %s180 = int_to_ptr.vmem [resolvable:$true] %s179
          %s181 = sshll.u32 %s178, 4
          %s182 = int_to_ptr.hbm [resolvable:$true] %s181
          %187 = dma.vmem_to_hbm [thread:$0]  %s180, 128, %s182, %s164, 64, 128, 4
        $region32: #{tpu_custom_call.1} parent=23 // pred_fallthru
          _
      $region24: #{tpu_custom_call.1} parent=5 // pred_fallthru
        _
      %p188 = scmp.le.s32.totalorder 2, %s13
      // Predicated region
      $region33: #{tpu_custom_call.1} parent=5 // pred_check
        %p189 = pneg %p188
      $region34: #{tpu_custom_call.1} parent=5 // pred_check_branch
        %191 = sbr.rel (%p189) target = $region36
      $region35: #{tpu_custom_call.1} parent=5 // pred_region
        %s192 = ssub.s32 %s13, 2
        // Predicated region
        $region37: #{tpu_custom_call.1} parent=35 // pred_check
          %p193 = pneg %p84
        $region38: #{tpu_custom_call.1} parent=35 // pred_check_branch
          %195 = sbr.rel (%p193) target = $region40
        $region39: #{tpu_custom_call.1} parent=35 // pred_region
          %s196 = sand.u32 %s69, 1
          %s197 = scalar_lea.sflag [#allocation4], %s196
          %s198 = sand.u32 %s69, 1
          %s199 = smul.addr %s198, 8
          %s200 = scalar_lea.vmem [#allocation5], %s199
          %202 = dma.done %s197, 128
        $region40: #{tpu_custom_call.1} parent=35 // pred_fallthru
          _
      $region36: #{tpu_custom_call.1} parent=5 // pred_fallthru
        _
    $region6: #{tpu_custom_call.1} parent=1 // loop_footer
      %s17 = sadd.s32 1, %s13
    $region7: #{tpu_custom_call.1} parent=1 // loop_footer_branch
      %12 = sbr.rel target = $region3
    $region8: #{tpu_custom_call.1} parent=1 // loop_exit
      _
    %203 = vsyncpa [#allocation3], 1
    %s204 = scalar_lea.sflag [#allocation3], 1
    %205 = vsyncpa %s204, 1
    %206 = vsyncpa [#allocation4], 1
    %s207 = scalar_lea.sflag [#allocation4], 1
    %208 = vsyncpa %s207, 1

</llo_original>
